<compile_context>
chip_gen: v7x
topology: tpu7x:2x2x1
jax: 0.10.0
libtpu: 0.0.40
codegen_flags: <defaults>
</compile_context>

<pallas_src>
import functools

import jax
import jax.numpy as jnp
from jax.experimental import pallas as pl
from jax.experimental.pallas import tpu as pltpu

# Logical dims of the inner MLP.
IN_F = 32
HID_F = 64
OUT_F = 16

QMIN = -128.0       # signed int8 fake-quant range
QMAX = 127.0
EPS = 1e-8


def _round_up(n, m):
    return (n + m - 1) // m * m


def _choose_tile_b(batch):
    """Large tiles amortize the ~0.35us/step grid overhead, but keep >= 2 grid
    steps so the "parallel" batch axis can shard across both v7x TensorCores."""
    tile = _round_up(max(batch // 2, 8), 8)
    return min(tile, 1024)


def calibrate_qparams(x_calib):
    """One-time QuantStub observer (global min/max -> scale / zero_point),
    like PyTorch calibration.  NOT part of the per-forward path."""
    x_min = jnp.minimum(jnp.min(x_calib), 0.0)
    x_max = jnp.maximum(jnp.max(x_calib), 0.0)
    scale = jnp.maximum((x_max - x_min) / (QMAX - QMIN), EPS)
    zp = jnp.clip(QMIN - jnp.round(x_min / scale), QMIN, QMAX)
    return jnp.stack([scale, 1.0 / scale, zp]).astype(jnp.float32)


def prepare_params(w1, b1, w2, b2):
    """One-time weight prep (cast / reshape); weights are static so this is
    not per-call overhead."""
    return (w1.astype(jnp.bfloat16),
            b1.reshape(1, -1).astype(jnp.float32),
            w2.astype(jnp.bfloat16),
            b2.reshape(1, -1).astype(jnp.float32))


def quant_mlp_kernel(qp_ref, x_ref, w1_ref, b1_ref, w2_ref, b2_ref, o_ref):
    """One batch tile of: QuantStub (int8 fake-quant) -> Linear -> ReLU -> Linear."""
    scale = qp_ref[0]        # f32 scalars in SMEM (static, calibrated)
    inv_scale = qp_ref[1]
    zp = qp_ref[2]

    x = x_ref[...]                                        # (TB, 32) f32, unpadded

    # ---- QuantStub: affine int8 fake-quantization on the narrow slab.
    q = jnp.clip(jnp.round(x * inv_scale) + zp, QMIN, QMAX)
    xq_int = q - zp                                       # |.| <= 255 -> exact in bf16

    # ---- model_fp32: Linear -> ReLU -> Linear (bf16 MXU inputs, f32 accumulate;
    #      dequant scale folded into the matmul epilogue -- matmul is linear).
    # TODO(synk): true-fp32 (Precision.HIGHEST) matmul path if bit-closer fp32
    #             Linear semantics are required; kernel is HBM-bound either way.
    h = scale * jnp.dot(xq_int.astype(jnp.bfloat16), w1_ref[...],
                        preferred_element_type=jnp.float32) + b1_ref[...]
    h = jnp.maximum(h, 0.0)
    y = jnp.dot(h.astype(jnp.bfloat16), w2_ref[...],
                preferred_element_type=jnp.float32) + b2_ref[...]

    # ---- DeQuantStub: output already fp32; stored unpadded (16 lanes).
    o_ref[...] = y.astype(o_ref.dtype)


@functools.partial(jax.jit, static_argnames=("tile_b",))
def quant_model_forward(x, qparams, w1, b1, w2, b2, *, tile_b):
    """x: (batch, IN_F) f32; qparams: (3,) f32 [scale, 1/scale, zp];
    w1: (IN_F, HID_F) bf16; b1: (1, HID_F) f32; w2: (HID_F, OUT_F) bf16; b2: (1, OUT_F) f32."""
    batch, in_f = x.shape
    hid_f = w1.shape[1]
    out_f = w2.shape[1]

    # Only the batch dim is (possibly) padded -- feature dims stay unpadded.
    b_p = _round_up(batch, tile_b)
    if b_p != batch:
        x = jnp.zeros((b_p, in_f), x.dtype).at[:batch].set(x)

    grid = (b_p // tile_b,)
    out = pl.pallas_call(
        quant_mlp_kernel,
        out_shape=jax.ShapeDtypeStruct((b_p, out_f), jnp.float32),
        grid=grid,
        in_specs=[
            pl.BlockSpec(memory_space=pltpu.MemorySpace.SMEM),   # qparams (scalars)
            pl.BlockSpec((tile_b, in_f), lambda i: (i, 0)),      # x: batch-tiled, full 32-wide last dim
            pl.BlockSpec((in_f, hid_f), lambda i: (0, 0)),       # w1: VMEM-resident
            pl.BlockSpec((1, hid_f), lambda i: (0, 0)),          # b1: VMEM-resident
            pl.BlockSpec((hid_f, out_f), lambda i: (0, 0)),      # w2: VMEM-resident
            pl.BlockSpec((1, out_f), lambda i: (0, 0)),          # b2: VMEM-resident
        ],
        out_specs=pl.BlockSpec((tile_b, out_f), lambda i: (i, 0)),  # unpadded 16-wide output
        compiler_params=pltpu.CompilerParams(
            dimension_semantics=("parallel",),                   # dual-TC shard on v7x
        ),
    )(qparams, x, w1, b1, w2, b2)

    if b_p != batch:
        out = out[:batch]
    return out


if __name__ == "__main__":
    BATCH = 256   # -> tile_b=128, 2 parallel grid steps (one per v7x TensorCore).

    key = jax.random.PRNGKey(0)
    kx, kw1, kb1, kw2, kb2 = jax.random.split(key, 5)

    x = jax.random.normal(kx, (BATCH, IN_F), dtype=jnp.float32)
    w1 = jax.random.normal(kw1, (IN_F, HID_F), dtype=jnp.float32) * (1.0 / IN_F ** 0.5)
    b1 = jax.random.normal(kb1, (HID_F,), dtype=jnp.float32) * 0.01
    w2 = jax.random.normal(kw2, (HID_F, OUT_F), dtype=jnp.float32) * (1.0 / HID_F ** 0.5)
    b2 = jax.random.normal(kb2, (OUT_F,), dtype=jnp.float32) * 0.01

    # One-time calibration (QuantStub observer) + one-time weight prep.
    qparams = calibrate_qparams(x)
    params = prepare_params(w1, b1, w2, b2)
    tile_b = _choose_tile_b(BATCH)

    out = quant_model_forward(x, qparams, *params, tile_b=tile_b)
    jax.block_until_ready(out)
    assert out.shape == (BATCH, OUT_F)

    # Pure-JAX reference with identical semantics (same static fake-quant, same
    # bf16 matmul inputs, f32 accumulation) on the unpadded shapes.
    scale, inv_scale, zp = qparams[0], qparams[1], qparams[2]
    q = jnp.clip(jnp.round(x * inv_scale) + zp, QMIN, QMAX)
    xq_int = (q - zp).astype(jnp.bfloat16)
    h_ref = scale * jnp.dot(xq_int, w1.astype(jnp.bfloat16),
                            preferred_element_type=jnp.float32) + b1[None, :]
    h_ref = jnp.maximum(h_ref, 0.0)
    y_ref = jnp.dot(h_ref.astype(jnp.bfloat16), w2.astype(jnp.bfloat16),
                    preferred_element_type=jnp.float32) + b2[None, :]

    assert jnp.allclose(out, y_ref, atol=1e-2, rtol=1e-2)

    print("KERNEL_OK")
</pallas_src>

<mosaic_0001>
module attributes {stable_mosaic.version = 11 : i64} {
  func.func @quant_mlp_kernel(%arg0: i32, %arg1: memref<3xf32, #tpu.memory_space<smem>>, %arg2: memref<128x32xf32, #tpu.memory_space<vmem>>, %arg3: memref<32x64xbf16, #tpu.memory_space<vmem>>, %arg4: memref<1x64xf32, #tpu.memory_space<vmem>>, %arg5: memref<64x16xbf16, #tpu.memory_space<vmem>>, %arg6: memref<1x16xf32, #tpu.memory_space<vmem>>, %arg7: memref<128x16xf32, #tpu.memory_space<vmem>>) attributes {dimension_semantics = [#tpu.dimension_semantics<parallel>], iteration_bounds = array<i64: 2>, scalar_prefetch = 0 : i64, scratch_operands = 0 : i64, tpu.core_type = #tpu.core_type<tc>, window_params = [{transform_indices = @transform_0, window_bounds = array<i64: 3>}, {transform_indices = @transform_1, window_bounds = array<i64: 128, 32>}, {pipeline_mode = #tpu.pipeline_mode<synchronous>, transform_indices = @transform_2, window_bounds = array<i64: 32, 64>}, {pipeline_mode = #tpu.pipeline_mode<synchronous>, transform_indices = @transform_3, window_bounds = array<i64: 1, 64>}, {pipeline_mode = #tpu.pipeline_mode<synchronous>, transform_indices = @transform_4, window_bounds = array<i64: 64, 16>}, {pipeline_mode = #tpu.pipeline_mode<synchronous>, transform_indices = @transform_5, window_bounds = array<i64: 1, 16>}, {transform_indices = @transform_6, window_bounds = array<i64: 128, 16>}]} {
    %c0 = arith.constant 0 : index
    %0 = memref.load %arg1[%c0] : memref<3xf32, #tpu.memory_space<smem>>
    %c1 = arith.constant 1 : index
    %1 = memref.load %arg1[%c1] : memref<3xf32, #tpu.memory_space<smem>>
    %c2 = arith.constant 2 : index
    %2 = memref.load %arg1[%c2] : memref<3xf32, #tpu.memory_space<smem>>
    %c0_0 = arith.constant 0 : index
    %c0_1 = arith.constant 0 : index
    %3 = vector.load %arg2[%c0_0, %c0_1] : memref<128x32xf32, #tpu.memory_space<vmem>>, vector<128x32xf32>
    %4 = vector.broadcast %1 : f32 to vector<128x32xf32>
    %5 = arith.mulf %3, %4 : vector<128x32xf32>
    %6 = math.roundeven %5 : vector<128x32xf32>
    %7 = vector.broadcast %2 : f32 to vector<128x32xf32>
    %8 = arith.addf %6, %7 : vector<128x32xf32>
    %cst = arith.constant -1.280000e+02 : f32
    %cst_2 = arith.constant 1.270000e+02 : f32
    %9 = vector.broadcast %cst : f32 to vector<128x32xf32>
    %10 = arith.maximumf %9, %8 : vector<128x32xf32>
    %11 = vector.broadcast %cst_2 : f32 to vector<128x32xf32>
    %12 = arith.minimumf %11, %10 : vector<128x32xf32>
    %13 = vector.broadcast %2 : f32 to vector<128x32xf32>
    %14 = arith.subf %12, %13 : vector<128x32xf32>
    %15 = arith.truncf %14 : vector<128x32xf32> to vector<128x32xbf16>
    %c0_3 = arith.constant 0 : index
    %c0_4 = arith.constant 0 : index
    %16 = vector.load %arg3[%c0_3, %c0_4] : memref<32x64xbf16, #tpu.memory_space<vmem>>, vector<32x64xbf16>
    %cst_5 = arith.constant dense<0.000000e+00> : vector<128x64xf32>
    %17 = tpu.matmul %15, %16, %cst_5 {dimension_numbers = #tpu.dot_dimension_numbers<[1], [0], [0], [1], [0, 0, 1, 1], [], []>} : vector<128x32xbf16>, vector<32x64xbf16>, vector<128x64xf32> -> vector<128x64xf32>
    %18 = vector.broadcast %0 : f32 to vector<128x64xf32>
    %19 = arith.mulf %18, %17 : vector<128x64xf32>
    %c0_6 = arith.constant 0 : index
    %c0_7 = arith.constant 0 : index
    %20 = vector.load %arg4[%c0_6, %c0_7] : memref<1x64xf32, #tpu.memory_space<vmem>>, vector<1x64xf32>
    %21 = vector.broadcast %20 : vector<1x64xf32> to vector<128x64xf32>
    %22 = arith.addf %19, %21 : vector<128x64xf32>
    %cst_8 = arith.constant 0.000000e+00 : f32
    %23 = vector.broadcast %cst_8 : f32 to vector<128x64xf32>
    %24 = arith.maximumf %22, %23 : vector<128x64xf32>
    %25 = arith.truncf %24 : vector<128x64xf32> to vector<128x64xbf16>
    %c0_9 = arith.constant 0 : index
    %c0_10 = arith.constant 0 : index
    %26 = vector.load %arg5[%c0_9, %c0_10] : memref<64x16xbf16, #tpu.memory_space<vmem>>, vector<64x16xbf16>
    %cst_11 = arith.constant dense<0.000000e+00> : vector<128x16xf32>
    %27 = tpu.matmul %25, %26, %cst_11 {dimension_numbers = #tpu.dot_dimension_numbers<[1], [0], [0], [1], [0, 0, 1, 1], [], []>} : vector<128x64xbf16>, vector<64x16xbf16>, vector<128x16xf32> -> vector<128x16xf32>
    %c0_12 = arith.constant 0 : index
    %c0_13 = arith.constant 0 : index
    %28 = vector.load %arg6[%c0_12, %c0_13] : memref<1x16xf32, #tpu.memory_space<vmem>>, vector<1x16xf32>
    %29 = vector.broadcast %28 : vector<1x16xf32> to vector<128x16xf32>
    %30 = arith.addf %27, %29 : vector<128x16xf32>
    %c0_14 = arith.constant 0 : index
    %c0_15 = arith.constant 0 : index
    %31 = vector.load %arg7[%c0_14, %c0_15] : memref<128x16xf32, #tpu.memory_space<vmem>>, vector<128x16xf32>
    tpu.vector_store %arg7[%c0_14, %c0_15], %30 {strides = array<i32>} : memref<128x16xf32, #tpu.memory_space<vmem>>, vector<128x16xf32>,
    return
  }
  func.func @transform_0(%arg0: i32) -> i32 {
    %c0_i32 = arith.constant 0 : i32
    %c0_i32_0 = arith.constant 0 : i32
    return %c0_i32 : i32
  }
  func.func @transform_1(%arg0: i32) -> (i32, i32) {
    %c0_i32 = arith.constant 0 : i32
    %c0_i32_0 = arith.constant 0 : i32
    return %arg0, %c0_i32 : i32, i32
  }
  func.func @transform_2(%arg0: i32) -> (i32, i32) {
    %c0_i32 = arith.constant 0 : i32
    %c0_i32_0 = arith.constant 0 : i32
    %c0_i32_1 = arith.constant 0 : i32
    return %c0_i32, %c0_i32_0 : i32, i32
  }
  func.func @transform_3(%arg0: i32) -> (i32, i32) {
    %c0_i32 = arith.constant 0 : i32
    %c0_i32_0 = arith.constant 0 : i32
    %c0_i32_1 = arith.constant 0 : i32
    return %c0_i32, %c0_i32_0 : i32, i32
  }
  func.func @transform_4(%arg0: i32) -> (i32, i32) {
    %c0_i32 = arith.constant 0 : i32
    %c0_i32_0 = arith.constant 0 : i32
    %c0_i32_1 = arith.constant 0 : i32
    return %c0_i32, %c0_i32_0 : i32, i32
  }
  func.func @transform_5(%arg0: i32) -> (i32, i32) {
    %c0_i32 = arith.constant 0 : i32
    %c0_i32_0 = arith.constant 0 : i32
    %c0_i32_1 = arith.constant 0 : i32
    return %c0_i32, %c0_i32_0 : i32, i32
  }
  func.func @transform_6(%arg0: i32) -> (i32, i32) {
    %c0_i32 = arith.constant 0 : i32
    %c0_i32_0 = arith.constant 0 : i32
    return %arg0, %c0_i32 : i32, i32
  }
}

</mosaic_0001>

<llo_original>
// kernel: quant_model_forward.1
$region0: #{quant_model_forward.1}
  #allocation0 [shape = 'u32[]', space=smem, size = 0x4, offset = 0x4, fixed_abs, tag = 'smem constant byte address 0x4 - core index']
  #allocation1 [shape = 'u32[144,128]{1,0:T(1,128)}', space=vmem, size = 0x12000, scoped, tag = 'internal scratch']
  %s0 = inlined_call_operand.vmem [shape: f32[3], index: 0, kind: input, shape index: {}]
  %s1 = inlined_call_operand.vmem [shape: f32[256,32], index: 1, kind: input, shape index: {}]
  %s2 = inlined_call_operand.vmem [shape: bf16[32,64], index: 2, kind: input, shape index: {}]
  %s3 = inlined_call_operand.vmem [shape: f32[1,64], index: 3, kind: input, shape index: {}]
  %s4 = inlined_call_operand.vmem [shape: bf16[64,16], index: 4, kind: input, shape index: {}]
  %s5 = inlined_call_operand.vmem [shape: f32[1,16], index: 5, kind: input, shape index: {}]
  %s6 = inlined_call_operand.vmem [shape: f32[256,16], index: 6, kind: output, shape index: {}]
  %s7 = sld [smem:[#allocation0]]
  $region61: #{quant_model_forward.1} parent=0
    _
  %s9 = ssub.s32 1, %s7
  %s10 = scalar_select 0, %s9, %s7
  $region1: #{quant_model_forward.1} parent=0
    #allocation2 [shape = 'u8[512]{0}', space=smem, size = 0x200, scoped, tag = 'input window, operand 0, single buffered']
    #allocation3 [shape = 's32[2]{0}', space=sflag, size = 0x8, scoped, tag = 'scoped memory for quant_model_forward.1']
    %11 = vsyncpa [#allocation3], 0
    loop: start=0, step=1, limit=4
    $region2: #{quant_model_forward.1} parent=1 // loop_pre_header
      _
    $region3: #{quant_model_forward.1} parent=1 // loop_header
      %s13 = sphi 0, %s17
      %p14 = scmp.ge.s32.totalorder %s13, 4
      %s21 = sphi 0, %s21
      %s23 = sphi 0, %s21
      %s24 = sphi 0, %s23
      %s38 = sphi 0, %s24
      %s44 = sphi 0, %s46
      %s47 = sphi 0, %s44
      %s48 = sphi 0, %s47
      %s64 = sphi 0, %s48
      %s68 = sphi 0, %s68
      %s70 = sphi 0, %s68
      %s71 = sphi 0, %s70
      %s85 = sphi 0, %s71
      %s89 = sphi 0, %s89
      %s91 = sphi 0, %s89
      %s92 = sphi 0, %s91
      %s106 = sphi 0, %s92
      %s110 = sphi 0, %s110
      %s112 = sphi 0, %s110
      %s113 = sphi 0, %s112
      %s127 = sphi 0, %s113
      %s131 = sphi 0, %s131
      %s133 = sphi 0, %s131
      %s134 = sphi 0, %s133
      %s148 = sphi 0, %s134
      %s154 = sphi 0, %s156
      %s157 = sphi 0, %s154
      %s158 = sphi 0, %s157
      %s174 = sphi 0, %s158
    $region4: #{quant_model_forward.1} parent=1 // loop_header_branch
      %16 = sbr.rel (%p14) target = $region8
    $region5: #{quant_model_forward.1} parent=1 // loop_body
      %s18 = ssub.s32 %s13, 1
      %s19 = ssub.s32 %s13, 2
      %s20 = sadd.s32 %s13, 1
      %s22 = sadd.s32 %s21, 1
      %p25 = scmp.eq.s32.totalorder %s13, 1
      %p26 = scmp.ne.s32.totalorder %s21, %s23
      %p27 = scmp.eq.s32.totalorder %s13, 0
      %p28 = por %p26, %p27
      %p29 = scmp.ne.s32.totalorder %s21, %s23
      %p30 = scmp.eq.s32.totalorder %s18, 1
      %p31 = por %p29, %p30
      %p32 = scmp.ne.s32.totalorder %s23, %s24
      %p33 = scmp.eq.s32.totalorder %s18, 0
      %p34 = por %p32, %p33
      %p35 = scmp.ne.s32.totalorder %s23, %s24
      %p36 = scmp.eq.s32.totalorder %s19, 1
      %p37 = por %p35, %p36
      %p39 = scmp.ne.s32.totalorder %s24, %s38
      %p40 = scmp.eq.s32.totalorder %s19, 0
      %p41 = por %p39, %p40
      %s42 = ssub.s32 %s13, %s20
      %p43 = scmp.eq.s32.totalorder %s42, 0
      %s45 = sadd.s32 %s44, 1
      %s46 = scalar_select %p43, %s44, %s45
      %p49 = pneg %p43
      %p50 = scmp.eq.s32.totalorder %s13, 1
      %p51 = por %p49, %p50
      %p52 = scmp.ne.s32.totalorder %s44, %s47
      %p53 = scmp.eq.s32.totalorder %s13, 0
      %p54 = por %p52, %p53
      %p55 = scmp.ne.s32.totalorder %s44, %s47
      %p56 = scmp.eq.s32.totalorder %s18, 1
      %p57 = por %p55, %p56
      %p58 = scmp.ne.s32.totalorder %s47, %s48
      %p59 = scmp.eq.s32.totalorder %s18, 0
      %p60 = por %p58, %p59
      %p61 = scmp.ne.s32.totalorder %s47, %s48
      %p62 = scmp.eq.s32.totalorder %s19, 1
      %p63 = por %p61, %p62
      %p65 = scmp.ne.s32.totalorder %s48, %s64
      %p66 = scmp.eq.s32.totalorder %s19, 0
      %p67 = por %p65, %p66
      %s69 = sadd.s32 %s68, 1
      %p72 = scmp.eq.s32.totalorder %s13, 1
      %p73 = scmp.ne.s32.totalorder %s68, %s70
      %p74 = scmp.eq.s32.totalorder %s13, 0
      %p75 = por %p73, %p74
      %p76 = scmp.ne.s32.totalorder %s68, %s70
      %p77 = scmp.eq.s32.totalorder %s18, 1
      %p78 = por %p76, %p77
      %p79 = scmp.ne.s32.totalorder %s70, %s71
      %p80 = scmp.eq.s32.totalorder %s18, 0
      %p81 = por %p79, %p80
      %p82 = scmp.ne.s32.totalorder %s70, %s71
      %p83 = scmp.eq.s32.totalorder %s19, 1
      %p84 = por %p82, %p83
      %p86 = scmp.ne.s32.totalorder %s71, %s85
      %p87 = scmp.eq.s32.totalorder %s19, 0
      %p88 = por %p86, %p87
      %s90 = sadd.s32 %s89, 1
      %p93 = scmp.eq.s32.totalorder %s13, 1
      %p94 = scmp.ne.s32.totalorder %s89, %s91
      %p95 = scmp.eq.s32.totalorder %s13, 0
      %p96 = por %p94, %p95
      %p97 = scmp.ne.s32.totalorder %s89, %s91
      %p98 = scmp.eq.s32.totalorder %s18, 1
      %p99 = por %p97, %p98
      %p100 = scmp.ne.s32.totalorder %s91, %s92
      %p101 = scmp.eq.s32.totalorder %s18, 0
      %p102 = por %p100, %p101
      %p103 = scmp.ne.s32.totalorder %s91, %s92
      %p104 = scmp.eq.s32.totalorder %s19, 1
      %p105 = por %p103, %p104
      %p107 = scmp.ne.s32.totalorder %s92, %s106
      %p108 = scmp.eq.s32.totalorder %s19, 0
      %p109 = por %p107, %p108
      %s111 = sadd.s32 %s110, 1
      %p114 = scmp.eq.s32.totalorder %s13, 1
      %p115 = scmp.ne.s32.totalorder %s110, %s112
      %p116 = scmp.eq.s32.totalorder %s13, 0
      %p117 = por %p115, %p116
      %p118 = scmp.ne.s32.totalorder %s110, %s112
      %p119 = scmp.eq.s32.totalorder %s18, 1
      %p120 = por %p118, %p119
      %p121 = scmp.ne.s32.totalorder %s112, %s113
      %p122 = scmp.eq.s32.totalorder %s18, 0
      %p123 = por %p121, %p122
      %p124 = scmp.ne.s32.totalorder %s112, %s113
      %p125 = scmp.eq.s32.totalorder %s19, 1
      %p126 = por %p124, %p125
      %p128 = scmp.ne.s32.totalorder %s113, %s127
      %p129 = scmp.eq.s32.totalorder %s19, 0
      %p130 = por %p128, %p129
      %s132 = sadd.s32 %s131, 1
      %p135 = scmp.eq.s32.totalorder %s13, 1
      %p136 = scmp.ne.s32.totalorder %s131, %s133
      %p137 = scmp.eq.s32.totalorder %s13, 0
      %p138 = por %p136, %p137
      %p139 = scmp.ne.s32.totalorder %s131, %s133
      %p140 = scmp.eq.s32.totalorder %s18, 1
      %p141 = por %p139, %p140
      %p142 = scmp.ne.s32.totalorder %s133, %s134
      %p143 = scmp.eq.s32.totalorder %s18, 0
      %p144 = por %p142, %p143
      %p145 = scmp.ne.s32.totalorder %s133, %s134
      %p146 = scmp.eq.s32.totalorder %s19, 1
      %p147 = por %p145, %p146
      %p149 = scmp.ne.s32.totalorder %s134, %s148
      %p150 = scmp.eq.s32.totalorder %s19, 0
      %p151 = por %p149, %p150
      %s152 = ssub.s32 %s13, %s20
      %p153 = scmp.eq.s32.totalorder %s152, 0
      %s155 = sadd.s32 %s154, 1
      %s156 = scalar_select %p153, %s154, %s155
      %p159 = pneg %p153
      %p160 = scmp.eq.s32.totalorder %s13, 1
      %p161 = por %p159, %p160
      %p162 = scmp.ne.s32.totalorder %s154, %s157
      %p163 = scmp.eq.s32.totalorder %s13, 0
      %p164 = por %p162, %p163
      %p165 = scmp.ne.s32.totalorder %s154, %s157
      %p166 = scmp.eq.s32.totalorder %s18, 1
      %p167 = por %p165, %p166
      %p168 = scmp.ne.s32.totalorder %s157, %s158
      %p169 = scmp.eq.s32.totalorder %s18, 0
      %p170 = por %p168, %p169
      %p171 = scmp.ne.s32.totalorder %s157, %s158
      %p172 = scmp.eq.s32.totalorder %s19, 1
      %p173 = por %p171, %p172
      %p175 = scmp.ne.s32.totalorder %s158, %s174
      %p176 = scmp.eq.s32.totalorder %s19, 0
      %p177 = por %p175, %p176
      %p178 = scmp.le.s32.totalorder 1, %s13
      %p179 = scmp.lt.s32.totalorder %s13, 3
      %p180 = pnand %p178, %p179
      %p181 = pneg %p180
      // Predicated region
      $region9: #{quant_model_forward.1} parent=5 // pred_check
        _
      $region10: #{quant_model_forward.1} parent=5 // pred_check_branch
        %183 = sbr.rel (%p180) target = $region12
      $region11: #{quant_model_forward.1} parent=5 // pred_region
        %s184 = ssub.s32 %s13, 1
        // Predicated region
        $region13: #{quant_model_forward.1} parent=11 // pred_check
          %p185 = pneg %p34
        $region14: #{quant_model_forward.1} parent=11 // pred_check_branch
          %187 = sbr.rel (%p185) target = $region16
        $region15: #{quant_model_forward.1} parent=11 // pred_region
          %s189 = ssub.s32 16, 16
          %190 = vsyncadd [#allocation3], %s189
          %s192 = sshll.u32 %s0, 4
          %s193 = int_to_ptr.vmem [resolvable:$true] %s192
          %195 = dma.vmem_to_smem %s193, 16, [#allocation2], [#allocation3]
        $region16: #{quant_model_forward.1} parent=11 // pred_fallthru
          _
        // Predicated region
        $region17: #{quant_model_forward.1} parent=11 // pred_check
          %p196 = pneg %p81
        $region18: #{quant_model_forward.1} parent=11 // pred_check_branch
          %198 = sbr.rel (%p196) target = $region20
        $region19: #{quant_model_forward.1} parent=11 // pred_region
          _
        $region20: #{quant_model_forward.1} parent=11 // pred_fallthru
          _
        // Predicated region
        $region21: #{quant_model_forward.1} parent=11 // pred_check
          %p199 = pneg %p102
        $region22: #{quant_model_forward.1} parent=11 // pred_check_branch
          %201 = sbr.rel (%p199) target = $region24
        $region23: #{quant_model_forward.1} parent=11 // pred_region
          _
        $region24: #{quant_model_forward.1} parent=11 // pred_fallthru
          _
        // Predicated region
        $region25: #{quant_model_forward.1} parent=11 // pred_check
          %p202 = pneg %p123
        $region26: #{quant_model_forward.1} parent=11 // pred_check_branch
          %204 = sbr.rel (%p202) target = $region28
        $region27: #{quant_model_forward.1} parent=11 // pred_region
          _
        $region28: #{quant_model_forward.1} parent=11 // pred_fallthru
          _
        // Predicated region
        $region29: #{quant_model_forward.1} parent=11 // pred_check
          %p205 = pneg %p144
        $region30: #{quant_model_forward.1} parent=11 // pred_check_branch
          %207 = sbr.rel (%p205) target = $region32
        $region31: #{quant_model_forward.1} parent=11 // pred_region
          _
        $region32: #{quant_model_forward.1} parent=11 // pred_fallthru
          _
      $region12: #{quant_model_forward.1} parent=5 // pred_fallthru
        _
      %p208 = scmp.lt.s32.totalorder %s13, 2
      // Predicated region
      $region33: #{quant_model_forward.1} parent=5 // pred_check
        %p209 = pneg %p208
      $region34: #{quant_model_forward.1} parent=5 // pred_check_branch
        %211 = sbr.rel (%p209) target = $region36
      $region35: #{quant_model_forward.1} parent=5 // pred_region
        // Predicated region
        $region37: #{quant_model_forward.1} parent=35 // pred_check
          %p212 = pneg %p54
        $region38: #{quant_model_forward.1} parent=35 // pred_check_branch
          %214 = sbr.rel (%p212) target = $region40
        $region39: #{quant_model_forward.1} parent=35 // pred_region
          %s215 = smul.u32 16, %s13
          %p216 = scmp.lt.s32.totalorder %s215, 31
          %s217 = scalar_select %p216, %s215, 31
          %s218 = smul.addr %s217, 8
          %s219 = scalar_lea.vmem %s1, %s218
          %s220 = smul.u32 16, %s13
        $region40: #{quant_model_forward.1} parent=35 // pred_fallthru
          _
      $region36: #{quant_model_forward.1} parent=5 // pred_fallthru
        _
      %p221 = scmp.le.s32.totalorder 1, %s13
      %p222 = scmp.lt.s32.totalorder %s13, 3
      %p223 = pnand %p221, %p222
      %p224 = pneg %p223
      // Predicated region
      $region41: #{quant_model_forward.1} parent=5 // pred_check
        _
      $region42: #{quant_model_forward.1} parent=5 // pred_check_branch
        %226 = sbr.rel (%p223) target = $region44
      $region43: #{quant_model_forward.1} parent=5 // pred_region
        %s227 = ssub.s32 %s13, 1
        // Predicated region
        $region45: #{quant_model_forward.1} parent=43 // pred_check
          %p228 = pneg %p34
        $region46: #{quant_model_forward.1} parent=43 // pred_check_branch
          %230 = sbr.rel (%p228) target = $region48
        $region47: #{quant_model_forward.1} parent=43 // pred_region
          %231 = dma.done [#allocation3], 16
        $region48: #{quant_model_forward.1} parent=43 // pred_fallthru
          _
        %232 = sfence
        %p233 = pneg %p34
        %p234 = pneg %p31
        %s235 = smul.u32 16, %s18
        %p236 = scmp.lt.s32.totalorder %s235, 31
        %s237 = scalar_select %p236, %s235, 31
        %s238 = smul.addr %s237, 8
        %s239 = scalar_lea.vmem %s1, %s238
        %p240 = pneg %p60
        %p241 = pneg %p57
        %p242 = pneg %p81
        %p243 = pneg %p78
        %p244 = pneg %p102
        %p245 = pneg %p99
        %p246 = pneg %p123
        %p247 = pneg %p120
        %p248 = pneg %p144
        %p249 = pneg %p141
        %p250 = pneg %p170
        %p251 = pneg %p167
        %s252 = smul.u32 16, %s18
        %p253 = scmp.lt.s32.totalorder %s252, 31
        %s254 = scalar_select %p253, %s252, 31
        %s255 = smul.addr %s254, 8
        %s256 = scalar_lea.vmem %s6, %s255
        %s257 = smul.u32 16, %s18
        %p258 = scmp.lt.s32.totalorder %s257, 31
        %s259 = scalar_select %p258, %s257, 31
        %s260 = smul.addr %s259, 8
        %s261 = scalar_lea.vmem %s1, %s260
        %s262 = smul.u32 16, %s18
        %s263 = smul.u32 16, %s18
        %p264 = scmp.lt.s32.totalorder %s263, 31
        %s265 = scalar_select %p264, %s263, 31
        %s266 = smul.addr %s265, 8
        %s267 = scalar_lea.vmem %s6, %s266
        %s268 = smul.u32 16, %s18
        %s270 = sld [smem:[#allocation2]]
        %s271 = sld [smem:[#allocation2 + $0x1]]
        %s272 = sld [smem:[#allocation2 + $0x2]]
        %v273 = vld [vmem:[%s261] sm:$0xff]
        %v274 = vld [vmem:[%s261 + $0x8] sm:$0xff]
        %v275 = vld [vmem:[%s261 + $0x10] sm:$0xff]
        %v276 = vld [vmem:[%s261 + $0x18] sm:$0xff]
        %v277 = vld [vmem:[%s261 + $0x20] sm:$0xff]
        %v278 = vld [vmem:[%s261 + $0x28] sm:$0xff]
        %v279 = vld [vmem:[%s261 + $0x30] sm:$0xff]
        %v280 = vld [vmem:[%s261 + $0x38] sm:$0xff]
        %v281 = vld [vmem:[%s261 + $0x40] sm:$0xff]
        %v282 = vld [vmem:[%s261 + $0x48] sm:$0xff]
        %v283 = vld [vmem:[%s261 + $0x50] sm:$0xff]
        %v284 = vld [vmem:[%s261 + $0x58] sm:$0xff]
        %v285 = vld [vmem:[%s261 + $0x60] sm:$0xff]
        %v286 = vld [vmem:[%s261 + $0x68] sm:$0xff]
        %v287 = vld [vmem:[%s261 + $0x70] sm:$0xff]
        %v288 = vld [vmem:[%s261 + $0x78] sm:$0xff]
        %v289 = vstv %s271
        %v290 = vmul.f32 %v273, %v289
        %v291 = vmul.f32 %v274, %v289
        %v292 = vmul.f32 %v275, %v289
        %v293 = vmul.f32 %v276, %v289
        %v294 = vmul.f32 %v277, %v289
        %v295 = vmul.f32 %v278, %v289
        %v296 = vmul.f32 %v279, %v289
        %v297 = vmul.f32 %v280, %v289
        %v298 = vmul.f32 %v281, %v289
        %v299 = vmul.f32 %v282, %v289
        %v300 = vmul.f32 %v283, %v289
        %v301 = vmul.f32 %v284, %v289
        %v302 = vmul.f32 %v285, %v289
        %v303 = vmul.f32 %v286, %v289
        %v304 = vmul.f32 %v287, %v289
        %v305 = vmul.f32 %v288, %v289
        %v306 = vround.ne.pseudo %v290
        %v307 = vround.ne.pseudo %v291
        %v308 = vround.ne.pseudo %v292
        %v309 = vround.ne.pseudo %v293
        %v310 = vround.ne.pseudo %v294
        %v311 = vround.ne.pseudo %v295
        %v312 = vround.ne.pseudo %v296
        %v313 = vround.ne.pseudo %v297
        %v314 = vround.ne.pseudo %v298
        %v315 = vround.ne.pseudo %v299
        %v316 = vround.ne.pseudo %v300
        %v317 = vround.ne.pseudo %v301
        %v318 = vround.ne.pseudo %v302
        %v319 = vround.ne.pseudo %v303
        %v320 = vround.ne.pseudo %v304
        %v321 = vround.ne.pseudo %v305
        %v322 = vstv %s272
        %v323 = vadd.f32 %v306, %v322
        %v324 = vadd.f32 %v307, %v322
        %v325 = vadd.f32 %v308, %v322
        %v326 = vadd.f32 %v309, %v322
        %v327 = vadd.f32 %v310, %v322
        %v328 = vadd.f32 %v311, %v322
        %v329 = vadd.f32 %v312, %v322
        %v330 = vadd.f32 %v313, %v322
        %v331 = vadd.f32 %v314, %v322
        %v332 = vadd.f32 %v315, %v322
        %v333 = vadd.f32 %v316, %v322
        %v334 = vadd.f32 %v317, %v322
        %v335 = vadd.f32 %v318, %v322
        %v336 = vadd.f32 %v319, %v322
        %v337 = vadd.f32 %v320, %v322
        %v338 = vadd.f32 %v321, %v322
        %v339 = vmax.f32 %v323, -128.0
        %v340 = vmax.f32 %v324, -128.0
        %v341 = vmax.f32 %v325, -128.0
        %v342 = vmax.f32 %v326, -128.0
        %v343 = vmax.f32 %v327, -128.0
        %v344 = vmax.f32 %v328, -128.0
        %v345 = vmax.f32 %v329, -128.0
        %v346 = vmax.f32 %v330, -128.0
        %v347 = vmax.f32 %v331, -128.0
        %v348 = vmax.f32 %v332, -128.0
        %v349 = vmax.f32 %v333, -128.0
        %v350 = vmax.f32 %v334, -128.0
        %v351 = vmax.f32 %v335, -128.0
        %v352 = vmax.f32 %v336, -128.0
        %v353 = vmax.f32 %v337, -128.0
        %v354 = vmax.f32 %v338, -128.0
        %v355 = vmin.f32 %v339, 127.0
        %v356 = vmin.f32 %v340, 127.0
        %v357 = vmin.f32 %v341, 127.0
        %v358 = vmin.f32 %v342, 127.0
        %v359 = vmin.f32 %v343, 127.0
        %v360 = vmin.f32 %v344, 127.0
        %v361 = vmin.f32 %v345, 127.0
        %v362 = vmin.f32 %v346, 127.0
        %v363 = vmin.f32 %v347, 127.0
        %v364 = vmin.f32 %v348, 127.0
        %v365 = vmin.f32 %v349, 127.0
        %v366 = vmin.f32 %v350, 127.0
        %v367 = vmin.f32 %v351, 127.0
        %v368 = vmin.f32 %v352, 127.0
        %v369 = vmin.f32 %v353, 127.0
        %v370 = vmin.f32 %v354, 127.0
        %v371 = vsub.f32 %v355, %v322
        %v372 = vsub.f32 %v356, %v322
        %v373 = vsub.f32 %v357, %v322
        %v374 = vsub.f32 %v358, %v322
        %v375 = vsub.f32 %v359, %v322
        %v376 = vsub.f32 %v360, %v322
        %v377 = vsub.f32 %v361, %v322
        %v378 = vsub.f32 %v362, %v322
        %v379 = vsub.f32 %v363, %v322
        %v380 = vsub.f32 %v364, %v322
        %v381 = vsub.f32 %v365, %v322
        %v382 = vsub.f32 %v366, %v322
        %v383 = vsub.f32 %v367, %v322
        %v384 = vsub.f32 %v368, %v322
        %v385 = vsub.f32 %v369, %v322
        %v386 = vsub.f32 %v370, %v322
        %v387 = vpack.c.bf16 %v372, %v371
        %v388 = vpack.c.bf16 %v374, %v373
        %v389 = vpack.c.bf16 %v376, %v375
        %v390 = vpack.c.bf16 %v378, %v377
        %v391 = vpack.c.bf16 %v380, %v379
        %v392 = vpack.c.bf16 %v382, %v381
        %v393 = vpack.c.bf16 %v384, %v383
        %v394 = vpack.c.bf16 %v386, %v385
        %v395 = vld [vmem:[%s2] sm:$0xf]
        %v396 = vld [vmem:[%s2 + $0x4] sm:$0xf]
        %v397 = vld [vmem:[%s2 + $0x8] sm:$0xf]
        %v398 = vld [vmem:[%s2 + $0xc] sm:$0xf]
        %v403 = vunpack.c.l.b16 %v395
        %v404 = vunpack.c.l.b16 %v396
        %v405 = vunpack.c.l.b16 %v397
        %v406 = vunpack.c.l.b16 %v398
        %v407 = vpack.c.b16 %v404, %v403
        %v408 = vpack.c.b16 %v406, %v405
        %vm411 = vcmask 261120
        %v413 = vsel %vm411, %v387, 0
        %v416 = vsel %vm411, %v388, 0
        %v419 = vsel %vm411, %v389, 0
        %v422 = vsel %vm411, %v390, 0
        %v425 = vsel %vm411, %v391, 0
        %v428 = vsel %vm411, %v392, 0
        %v431 = vsel %vm411, %v393, 0
        %v434 = vsel %vm411, %v394, 0
        %436 = vmatprep.subr.bf16.mxu0 0
        %437 = vmatpush1.bf16.msra.mxu0 %v407
        %438 = vmatprep.subr.bf16.mxu0 0
        %439 = vmatpush1.bf16.msra.mxu0 %v408
        %440 = vmatprep.subr.bf16.mxu0 0
        %441 = vmatpush1.bf16.msra.mxu0 0
        %442 = vmatprep.subr.bf16.mxu0 0
        %443 = vmatpush1.bf16.msra.mxu0 0
        %444 = vmatprep.subr.bf16.mxu0 0
        %445 = vmatpush1.bf16.msra.mxu0 0
        %446 = vmatprep.subr.bf16.mxu0 0
        %447 = vmatpush1.bf16.msra.mxu0 0
        %448 = vmatprep.subr.bf16.mxu0 0
        %449 = vmatpush1.bf16.msra.mxu0 0
        %450 = vmatprep.subr.bf16.mxu0 0
        %451 = vmatpush1.bf16.msra.mxu0 0
        %452 = vmatprep.subr.bf16.mxu0 0
        %453 = vmatpush1.bf16.msra.mxu0 0
        %454 = vmatprep.subr.bf16.mxu0 0
        %455 = vmatpush1.bf16.msra.mxu0 0
        %456 = vmatprep.subr.bf16.mxu0 0
        %457 = vmatpush1.bf16.msra.mxu0 0
        %458 = vmatprep.subr.bf16.mxu0 0
        %459 = vmatpush1.bf16.msra.mxu0 0
        %460 = vmatprep.subr.bf16.mxu0 0
        %461 = vmatpush1.bf16.msra.mxu0 0
        %462 = vmatprep.subr.bf16.mxu0 0
        %463 = vmatpush1.bf16.msra.mxu0 0
        %464 = vmatprep.subr.bf16.mxu0 0
        %465 = vmatpush1.bf16.msra.mxu0 0
        %466 = vmatprep.subr.bf16.mxu0 0
        %467 = vmatpush1.bf16.msra.mxu0 0
        %468 = vmatprep.mubr.bf16.mxu0 0
        %469 = vmatmul.mubr.bf16.gmra.mrb[0].mxu0 %v413
        %v470 = vpop.f32.mrb[0].mxu0
        %v471 = vadd.f32 0.0, %v470
        %v472 = vpop.f32.mrb[0].mxu0
        %v473 = vpop.f32.mrb[0].mxu0
        %v474 = vadd.f32 0.0, %v473
        %v475 = vpop.f32.mrb[0].mxu0
        %476 = vmatprep.mubr.bf16.mxu0 0
        %477 = vmatmul.mubr.bf16.gmra.mrb[0].mxu0 %v416
        %v478 = vpop.f32.mrb[0].mxu0
        %v479 = vadd.f32 0.0, %v478
        %v480 = vpop.f32.mrb[0].mxu0
        %v481 = vpop.f32.mrb[0].mxu0
        %v482 = vadd.f32 0.0, %v481
        %v483 = vpop.f32.mrb[0].mxu0
        %484 = vmatprep.mubr.bf16.mxu0 0
        %485 = vmatmul.mubr.bf16.gmra.mrb[0].mxu0 %v419
        %v486 = vpop.f32.mrb[0].mxu0
        %v487 = vadd.f32 0.0, %v486
        %v488 = vpop.f32.mrb[0].mxu0
        %v489 = vpop.f32.mrb[0].mxu0
        %v490 = vadd.f32 0.0, %v489
        %v491 = vpop.f32.mrb[0].mxu0
        %492 = vmatprep.mubr.bf16.mxu0 0
        %493 = vmatmul.mubr.bf16.gmra.mrb[0].mxu0 %v422
        %v494 = vpop.f32.mrb[0].mxu0
        %v495 = vadd.f32 0.0, %v494
        %v496 = vpop.f32.mrb[0].mxu0
        %v497 = vpop.f32.mrb[0].mxu0
        %v498 = vadd.f32 0.0, %v497
        %v499 = vpop.f32.mrb[0].mxu0
        %500 = vmatprep.mubr.bf16.mxu0 0
        %501 = vmatmul.mubr.bf16.gmra.mrb[0].mxu0 %v425
        %v502 = vpop.f32.mrb[0].mxu0
        %v503 = vadd.f32 0.0, %v502
        %v504 = vpop.f32.mrb[0].mxu0
        %v505 = vpop.f32.mrb[0].mxu0
        %v506 = vadd.f32 0.0, %v505
        %v507 = vpop.f32.mrb[0].mxu0
        %508 = vmatprep.mubr.bf16.mxu0 0
        %509 = vmatmul.mubr.bf16.gmra.mrb[0].mxu0 %v428
        %v510 = vpop.f32.mrb[0].mxu0
        %v511 = vadd.f32 0.0, %v510
        %v512 = vpop.f32.mrb[0].mxu0
        %v513 = vpop.f32.mrb[0].mxu0
        %v514 = vadd.f32 0.0, %v513
        %v515 = vpop.f32.mrb[0].mxu0
        %516 = vmatprep.mubr.bf16.mxu0 0
        %517 = vmatmul.mubr.bf16.gmra.mrb[0].mxu0 %v431
        %v518 = vpop.f32.mrb[0].mxu0
        %v519 = vadd.f32 0.0, %v518
        %v520 = vpop.f32.mrb[0].mxu0
        %v521 = vpop.f32.mrb[0].mxu0
        %v522 = vadd.f32 0.0, %v521
        %v523 = vpop.f32.mrb[0].mxu0
        %524 = vmatprep.mubr.bf16.mxu0 0
        %525 = vmatmul.mubr.bf16.gmra.mrb[0].mxu0 %v434
        %v526 = vpop.f32.mrb[0].mxu0
        %v527 = vadd.f32 0.0, %v526
        %v528 = vpop.f32.mrb[0].mxu0
        %v529 = vpop.f32.mrb[0].mxu0
        %v530 = vadd.f32 0.0, %v529
        %v531 = vpop.f32.mrb[0].mxu0
        %532 = vdwg.mxu0
        %v533 = vstv %s270
        %v534 = vmul.f32 %v533, %v471
        %v535 = vmul.f32 %v533, %v474
        %v536 = vmul.f32 %v533, %v479
        %v537 = vmul.f32 %v533, %v482
        %v538 = vmul.f32 %v533, %v487
        %v539 = vmul.f32 %v533, %v490
        %v540 = vmul.f32 %v533, %v495
        %v541 = vmul.f32 %v533, %v498
        %v542 = vmul.f32 %v533, %v503
        %v543 = vmul.f32 %v533, %v506
        %v544 = vmul.f32 %v533, %v511
        %v545 = vmul.f32 %v533, %v514
        %v546 = vmul.f32 %v533, %v519
        %v547 = vmul.f32 %v533, %v522
        %v548 = vmul.f32 %v533, %v527
        %v549 = vmul.f32 %v533, %v530
        %v550 = vld [vmem:[%s3] sm:$0x1]
        %v552 = vlaneseq
        %v553 = vshrl.u32 %v552, 7
        %v554 = vsub.s32 0, %v553
        %v555 = vrot.slane %v550, %v554
        %v557 = vadd.f32 %v534, %v555
        %v558 = vadd.f32 %v535, %v555
        %v559 = vadd.f32 %v536, %v555
        %v560 = vadd.f32 %v537, %v555
        %v561 = vadd.f32 %v538, %v555
        %v562 = vadd.f32 %v539, %v555
        %v563 = vadd.f32 %v540, %v555
        %v564 = vadd.f32 %v541, %v555
        %v565 = vadd.f32 %v542, %v555
        %v566 = vadd.f32 %v543, %v555
        %v567 = vadd.f32 %v544, %v555
        %v568 = vadd.f32 %v545, %v555
        %v569 = vadd.f32 %v546, %v555
        %v570 = vadd.f32 %v547, %v555
        %v571 = vadd.f32 %v548, %v555
        %v572 = vadd.f32 %v549, %v555
        %v573 = vmax.f32 %v557, 0.0
        %v574 = vmax.f32 %v558, 0.0
        %v575 = vmax.f32 %v559, 0.0
        %v576 = vmax.f32 %v560, 0.0
        %v577 = vmax.f32 %v561, 0.0
        %v578 = vmax.f32 %v562, 0.0
        %v579 = vmax.f32 %v563, 0.0
        %v580 = vmax.f32 %v564, 0.0
        %v581 = vmax.f32 %v565, 0.0
        %v582 = vmax.f32 %v566, 0.0
        %v583 = vmax.f32 %v567, 0.0
        %v584 = vmax.f32 %v568, 0.0
        %v585 = vmax.f32 %v569, 0.0
        %v586 = vmax.f32 %v570, 0.0
        %v587 = vmax.f32 %v571, 0.0
        %v588 = vmax.f32 %v572, 0.0
        %v589 = vpack.c.bf16 %v574, %v573
        %v590 = vpack.c.bf16 %v576, %v575
        %v591 = vpack.c.bf16 %v578, %v577
        %v592 = vpack.c.bf16 %v580, %v579
        %v593 = vpack.c.bf16 %v582, %v581
        %v594 = vpack.c.bf16 %v584, %v583
        %v595 = vpack.c.bf16 %v586, %v585
        %v596 = vpack.c.bf16 %v588, %v587
        %v597 = vld [vmem:[%s4] sm:$0xf]
        %v598 = vld [vmem:[%s4 + $0x4] sm:$0xf]
        %v599 = vld [vmem:[%s4 + $0x8] sm:$0xf]
        %v600 = vld [vmem:[%s4 + $0xc] sm:$0xf]
        %v601 = vld [vmem:[%s4 + $0x10] sm:$0xf]
        %v602 = vld [vmem:[%s4 + $0x14] sm:$0xf]
        %v603 = vld [vmem:[%s4 + $0x18] sm:$0xf]
        %v604 = vld [vmem:[%s4 + $0x1c] sm:$0xf]
        %v605 = vld [vmem:[%s5] sm:$0x1]
        %v607 = vlaneseq
        %v608 = vshrl.u32 %v607, 7
        %v609 = vsub.s32 0, %v608
        %v610 = vrot.slane %v605, %v609
        %v620 = vunpack.c.l.b16 %v597
        %v621 = vunpack.c.l.b16 %v598
        %v622 = vunpack.c.l.b16 %v599
        %v623 = vunpack.c.l.b16 %v600
        %v624 = vunpack.c.l.b16 %v601
        %v625 = vunpack.c.l.b16 %v602
        %v626 = vunpack.c.l.b16 %v603
        %v627 = vunpack.c.l.b16 %v604
        %v628 = vpack.c.b16 %v621, %v620
        %v629 = vpack.c.b16 %v623, %v622
        %v630 = vpack.c.b16 %v625, %v624
        %v631 = vpack.c.b16 %v627, %v626
        %vm636 = vcmask 523264
        %v638 = vsel %vm636, %v589, 0
        %v641 = vsel %vm636, %v590, 0
        %v644 = vsel %vm636, %v591, 0
        %v647 = vsel %vm636, %v592, 0
        %v650 = vsel %vm636, %v593, 0
        %v653 = vsel %vm636, %v594, 0
        %v656 = vsel %vm636, %v595, 0
        %v659 = vsel %vm636, %v596, 0
        %661 = vmatprep.subr.bf16.mxu0 0
        %662 = vmatpush1.bf16.msra.mxu0 %v628
        %663 = vmatprep.subr.bf16.mxu0 0
        %664 = vmatpush1.bf16.msra.mxu0 %v629
        %665 = vmatprep.subr.bf16.mxu0 0
        %666 = vmatpush1.bf16.msra.mxu0 %v630
        %667 = vmatprep.subr.bf16.mxu0 0
        %668 = vmatpush1.bf16.msra.mxu0 %v631
        %669 = vmatprep.subr.bf16.mxu0 0
        %670 = vmatpush1.bf16.msra.mxu0 0
        %671 = vmatprep.subr.bf16.mxu0 0
        %672 = vmatpush1.bf16.msra.mxu0 0
        %673 = vmatprep.subr.bf16.mxu0 0
        %674 = vmatpush1.bf16.msra.mxu0 0
        %675 = vmatprep.subr.bf16.mxu0 0
        %676 = vmatpush1.bf16.msra.mxu0 0
        %677 = vmatprep.subr.bf16.mxu0 0
        %678 = vmatpush1.bf16.msra.mxu0 0
        %679 = vmatprep.subr.bf16.mxu0 0
        %680 = vmatpush1.bf16.msra.mxu0 0
        %681 = vmatprep.subr.bf16.mxu0 0
        %682 = vmatpush1.bf16.msra.mxu0 0
        %683 = vmatprep.subr.bf16.mxu0 0
        %684 = vmatpush1.bf16.msra.mxu0 0
        %685 = vmatprep.subr.bf16.mxu0 0
        %686 = vmatpush1.bf16.msra.mxu0 0
        %687 = vmatprep.subr.bf16.mxu0 0
        %688 = vmatpush1.bf16.msra.mxu0 0
        %689 = vmatprep.subr.bf16.mxu0 0
        %690 = vmatpush1.bf16.msra.mxu0 0
        %691 = vmatprep.subr.bf16.mxu0 0
        %692 = vmatpush1.bf16.msra.mxu0 0
        %693 = vmatprep.mubr.bf16.mxu0 0
        %694 = vmatmul.mubr.bf16.gmra.mrb[0].mxu0 %v638
        %v695 = vpop.f32.mrb[0].mxu0
        %v696 = vadd.f32 %v610, %v695
        %v697 = vpop.f32.mrb[0].mxu0
        %v698 = vpop.f32.mrb[0].mxu0
        %v699 = vadd.f32 %v610, %v698
        %v700 = vpop.f32.mrb[0].mxu0
        %701 = vmatprep.mubr.bf16.mxu0 0
        %702 = vmatmul.mubr.bf16.gmra.mrb[0].mxu0 %v641
        %v703 = vpop.f32.mrb[0].mxu0
        %v704 = vadd.f32 %v610, %v703
        %v705 = vpop.f32.mrb[0].mxu0
        %v706 = vpop.f32.mrb[0].mxu0
        %v707 = vadd.f32 %v610, %v706
        %v708 = vpop.f32.mrb[0].mxu0
        %709 = vmatprep.mubr.bf16.mxu0 0
        %710 = vmatmul.mubr.bf16.gmra.mrb[0].mxu0 %v644
        %v711 = vpop.f32.mrb[0].mxu0
        %v712 = vadd.f32 %v610, %v711
        %v713 = vpop.f32.mrb[0].mxu0
        %v714 = vpop.f32.mrb[0].mxu0
        %v715 = vadd.f32 %v610, %v714
        %v716 = vpop.f32.mrb[0].mxu0
        %717 = vmatprep.mubr.bf16.mxu0 0
        %718 = vmatmul.mubr.bf16.gmra.mrb[0].mxu0 %v647
        %v719 = vpop.f32.mrb[0].mxu0
        %v720 = vadd.f32 %v610, %v719
        %v721 = vpop.f32.mrb[0].mxu0
        %v722 = vpop.f32.mrb[0].mxu0
        %v723 = vadd.f32 %v610, %v722
        %v724 = vpop.f32.mrb[0].mxu0
        %725 = vmatprep.mubr.bf16.mxu0 0
        %726 = vmatmul.mubr.bf16.gmra.mrb[0].mxu0 %v650
        %v727 = vpop.f32.mrb[0].mxu0
        %v728 = vadd.f32 %v610, %v727
        %v729 = vpop.f32.mrb[0].mxu0
        %v730 = vpop.f32.mrb[0].mxu0
        %v731 = vadd.f32 %v610, %v730
        %v732 = vpop.f32.mrb[0].mxu0
        %733 = vmatprep.mubr.bf16.mxu0 0
        %734 = vmatmul.mubr.bf16.gmra.mrb[0].mxu0 %v653
        %v735 = vpop.f32.mrb[0].mxu0
        %v736 = vadd.f32 %v610, %v735
        %v737 = vpop.f32.mrb[0].mxu0
        %v738 = vpop.f32.mrb[0].mxu0
        %v739 = vadd.f32 %v610, %v738
        %v740 = vpop.f32.mrb[0].mxu0
        %741 = vmatprep.mubr.bf16.mxu0 0
        %742 = vmatmul.mubr.bf16.gmra.mrb[0].mxu0 %v656
        %v743 = vpop.f32.mrb[0].mxu0
        %v744 = vadd.f32 %v610, %v743
        %v745 = vpop.f32.mrb[0].mxu0
        %v746 = vpop.f32.mrb[0].mxu0
        %v747 = vadd.f32 %v610, %v746
        %v748 = vpop.f32.mrb[0].mxu0
        %749 = vmatprep.mubr.bf16.mxu0 0
        %750 = vmatmul.mubr.bf16.gmra.mrb[0].mxu0 %v659
        %v751 = vpop.f32.mrb[0].mxu0
        %v752 = vadd.f32 %v610, %v751
        %v753 = vpop.f32.mrb[0].mxu0
        %v754 = vpop.f32.mrb[0].mxu0
        %v755 = vadd.f32 %v610, %v754
        %v756 = vpop.f32.mrb[0].mxu0
        %757 = vdwg.mxu0
        %vm758 = vcmask 130048
        %759 = vst.msk [vmem:[%s267] sm:$0xff] %vm758, %v696
        %760 = vst.msk [vmem:[%s267 + $0x8] sm:$0xff] %vm758, %v699
        %761 = vst.msk [vmem:[%s267 + $0x10] sm:$0xff] %vm758, %v704
        %762 = vst.msk [vmem:[%s267 + $0x18] sm:$0xff] %vm758, %v707
        %763 = vst.msk [vmem:[%s267 + $0x20] sm:$0xff] %vm758, %v712
        %764 = vst.msk [vmem:[%s267 + $0x28] sm:$0xff] %vm758, %v715
        %765 = vst.msk [vmem:[%s267 + $0x30] sm:$0xff] %vm758, %v720
        %766 = vst.msk [vmem:[%s267 + $0x38] sm:$0xff] %vm758, %v723
        %767 = vst.msk [vmem:[%s267 + $0x40] sm:$0xff] %vm758, %v728
        %768 = vst.msk [vmem:[%s267 + $0x48] sm:$0xff] %vm758, %v731
        %769 = vst.msk [vmem:[%s267 + $0x50] sm:$0xff] %vm758, %v736
        %770 = vst.msk [vmem:[%s267 + $0x58] sm:$0xff] %vm758, %v739
        %771 = vst.msk [vmem:[%s267 + $0x60] sm:$0xff] %vm758, %v744
        %772 = vst.msk [vmem:[%s267 + $0x68] sm:$0xff] %vm758, %v747
        %773 = vst.msk [vmem:[%s267 + $0x70] sm:$0xff] %vm758, %v752
        %774 = vst.msk [vmem:[%s267 + $0x78] sm:$0xff] %vm758, %v755
        %s775 = smul.u32 16, %s18
        %p776 = scmp.lt.s32.totalorder %s775, 31
        %s777 = scalar_select %p776, %s775, 31
        %s778 = smul.addr %s777, 8
        %s779 = scalar_lea.vmem %s6, %s778
        // Predicated region
        $region49: #{quant_model_forward.1} parent=43 // pred_check
          %p780 = pneg %p167
        $region50: #{quant_model_forward.1} parent=43 // pred_check_branch
          %782 = sbr.rel (%p780) target = $region52
        $region51: #{quant_model_forward.1} parent=43 // pred_region
          %s783 = smul.u32 16, %s18
        $region52: #{quant_model_forward.1} parent=43 // pred_fallthru
          _
      $region44: #{quant_model_forward.1} parent=5 // pred_fallthru
        _
      %p784 = scmp.le.s32.totalorder 2, %s13
      // Predicated region
      $region53: #{quant_model_forward.1} parent=5 // pred_check
        %p785 = pneg %p784
      $region54: #{quant_model_forward.1} parent=5 // pred_check_branch
        %787 = sbr.rel (%p785) target = $region56
      $region55: #{quant_model_forward.1} parent=5 // pred_region
        %s788 = ssub.s32 %s13, 2
        // Predicated region
        $region57: #{quant_model_forward.1} parent=55 // pred_check
          %p789 = pneg %p173
        $region58: #{quant_model_forward.1} parent=55 // pred_check_branch
          %791 = sbr.rel (%p789) target = $region60
        $region59: #{quant_model_forward.1} parent=55 // pred_region
          %s792 = smul.u32 16, %s19
          %p793 = scmp.lt.s32.totalorder %s792, 31
          %s794 = scalar_select %p793, %s792, 31
          %s795 = smul.addr %s794, 8
          %s796 = scalar_lea.vmem %s6, %s795
        $region60: #{quant_model_forward.1} parent=55 // pred_fallthru
          _
      $region56: #{quant_model_forward.1} parent=5 // pred_fallthru
        _
    $region6: #{quant_model_forward.1} parent=1 // loop_footer
      %s17 = sadd.s32 1, %s13
    $region7: #{quant_model_forward.1} parent=1 // loop_footer_branch
      %12 = sbr.rel target = $region3
    $region8: #{quant_model_forward.1} parent=1 // loop_exit
      _
    %797 = vsyncpa [#allocation3], 1
    %s798 = scalar_lea.sflag [#allocation3], 1
    %799 = vsyncpa %s798, 1

</llo_original>
